<compile_context>
chip_gen: v5e
topology: v5e:2x2
jax: 0.10.0
libtpu: 0.0.40
codegen_flags: <defaults>
</compile_context>

<pallas_src>
import functools

import jax
import jax.numpy as jnp
import numpy as np
from jax.experimental import pallas as pl
from jax.experimental.pallas import tpu as pltpu


def _basic_block_kernel(x_ref, w1_ref, b1_ref, w2_ref, b2_ref, mask_ref,
                        pool_ref, o_ref, *, W, L):
    """One grid step = `fold` images laid out contiguously on the lane axis.

    x_ref:    (CinP, L)        activations, L = fold * H * W
    w*_ref:   (CoutP, 9*CinP)  im2col weights (tap-major, channel-minor)
    b*_ref:   (CoutP, 1)
    mask_ref: (9, L)           per-tap boundary masks (image + batch seams)
    pool_ref: (L, L//4)        0/1 selection matrix compacting even (h, w)
    o_ref:    (Cout, L//4)
    """
    masks = mask_ref[...]                                      # (9, L)

    def conv3x3_relu(act, w2d, b):
        # act: (cinP, L) f32 -> (coutP, L) f32
        taps = []
        t = 0
        for dy in range(3):
            for dx in range(3):
                off = (dy - 1) * W + (dx - 1)
                if off == 0:
                    s = act
                else:
                    # lane rotate (XLU); wrap-around lanes are killed by masks
                    s = pltpu.roll(act, (-off) % L, axis=1)
                if not (dy == 1 and dx == 1):
                    s = s * masks[t:t + 1, :]                  # VPU, cheap
                taps.append(s)
                t += 1
        patch = jnp.concatenate(taps, axis=0)                  # (9*cinP, L), 8-sublane aligned
        y = jnp.dot(w2d, patch, preferred_element_type=jnp.float32)
        return jnp.maximum(y + b, 0.0)

    x = x_ref[...].astype(jnp.float32)                         # (CinP, L)
    y1 = conv3x3_relu(x, w1_ref[...], b1_ref[...])             # (CmidP, L)
    y2 = conv3x3_relu(y1, w2_ref[...], b2_ref[...])            # (Cout,  L)

    # 2x2 stride-2 max-pool: window max via rolls+maxes, then one 0/1 gather
    # matmul to compact the (even h, even w) lanes.  Selected lanes never read
    # wrapped / cross-image values, so no extra masking is needed.
    m = jnp.maximum(y2, pltpu.roll(y2, L - 1, axis=1))         # max over w, w+1
    m = jnp.maximum(m, pltpu.roll(m, L - W, axis=1))           # max over h, h+1
    o_ref[...] = jnp.dot(m, pool_ref[...],
                         preferred_element_type=jnp.float32).astype(o_ref.dtype)


def _pick_fold(B, HW, HWq, max_lanes=2048):
    """Images per grid step: smallest divisor of B giving >=128 output lanes
    (dense stores), capped so the per-step working set stays small."""
    fold = 1
    for f in range(1, B + 1):
        if B % f != 0 or f * HW > max_lanes:
            continue
        fold = f
        if f * HWq >= 128:
            break
    return fold


def basic_block(x_nchw, w1_oihw, b1, w2_oihw, b2):
    """x_nchw: (B, Cin, H, W) f32; weights/biases in PyTorch OIHW layout."""
    B, Cin, H, W = x_nchw.shape
    Cmid = w1_oihw.shape[0]
    Cout = w2_oihw.shape[0]
    assert H % 2 == 0 and W % 2 == 0
    HW = H * W
    HWq = (H // 2) * (W // 2)

    # Sublane-align the contraction channel dims (review item: misaligned
    # (4, L) taps force retiling copies).
    CinP = ((Cin + 7) // 8) * 8
    CmidP = ((Cmid + 7) // 8) * 8

    fold = _pick_fold(B, HW, HWq)
    grid = (B // fold,)
    Lf = fold * HW          # lanes per grid step (input side)
    Lq = fold * HWq         # lanes per grid step (output side)

    # Activations: (B, Cin, H, W) -> (CinP, B*HW).  Tiny transpose (8 KiB).
    x_flat = jnp.transpose(x_nchw, (1, 0, 2, 3)).reshape(Cin, B * HW)
    x_p = jnp.pad(x_flat, ((0, CinP - Cin), (0, 0)))

    # Weights as 2-D im2col operands, tap-major / channel-minor, channel dims
    # zero-padded to the aligned sizes (padded columns multiply zero data).
    w1_t = jnp.transpose(w1_oihw, (0, 2, 3, 1))                      # (Cmid,3,3,Cin)
    w1_t = jnp.pad(w1_t, ((0, CmidP - Cmid), (0, 0), (0, 0), (0, CinP - Cin)))
    w1_2d = w1_t.reshape(CmidP, 9 * CinP)
    b1_2d = jnp.pad(b1, (0, CmidP - Cmid)).reshape(CmidP, 1)

    w2_t = jnp.transpose(w2_oihw, (0, 2, 3, 1))                      # (Cout,3,3,Cmid)
    w2_t = jnp.pad(w2_t, ((0, 0), (0, 0), (0, 0), (0, CmidP - Cmid)))
    w2_2d = w2_t.reshape(Cout, 9 * CmidP)
    b2_2d = b2.reshape(Cout, 1)

    # Per-tap boundary masks over the folded lane axis.  Top/bottom rows also
    # guard the batch seam (taps must not bleed into the neighbouring image).
    p = np.arange(Lf)
    h_pos = (p % HW) // W
    w_pos = p % W
    top, bot = (h_pos != 0), (h_pos != H - 1)
    left, right = (w_pos != 0), (w_pos != W - 1)
    rows = []
    for dy in range(3):
        for dx in range(3):
            m = np.ones(Lf, np.bool_)
            if dy == 0: m &= top
            if dy == 2: m &= bot
            if dx == 0: m &= left
            if dx == 2: m &= right
            rows.append(m)
    masks = jnp.asarray(np.stack(rows).astype(np.float32))           # (9, Lf)

    # Pool compaction matrix: pool[p, q] == 1 iff lane p is the top-left
    # corner (even h, even w) of output window q.  Size O(Lf * Lq); keep Lf
    # capped (see _pick_fold) so this stays VMEM-friendly on v7x.
    pool_np = np.zeros((Lf, Lq), np.float32)
    for bi in range(fold):
        for ho in range(H // 2):
            for wo in range(W // 2):
                pool_np[bi * HW + (2 * ho) * W + 2 * wo,
                        bi * HWq + ho * (W // 2) + wo] = 1.0
    pool = jnp.asarray(pool_np)

    kernel = functools.partial(_basic_block_kernel, W=W, L=Lf)

    # Constant operands (weights/masks/pool) keep the same block index every
    # step, so the pipeline does not re-DMA them across steps.
    out_flat = pl.pallas_call(
        kernel,
        out_shape=jax.ShapeDtypeStruct((Cout, B * HWq), jnp.float32),
        grid=grid,
        in_specs=[
            pl.BlockSpec((CinP, Lf), lambda g: (0, g)),
            pl.BlockSpec((CmidP, 9 * CinP), lambda g: (0, 0)),
            pl.BlockSpec((CmidP, 1), lambda g: (0, 0)),
            pl.BlockSpec((Cout, 9 * CmidP), lambda g: (0, 0)),
            pl.BlockSpec((Cout, 1), lambda g: (0, 0)),
            pl.BlockSpec((9, Lf), lambda g: (0, 0)),
            pl.BlockSpec((Lf, Lq), lambda g: (0, 0)),
        ],
        out_specs=pl.BlockSpec((Cout, Lq), lambda g: (0, g)),
        compiler_params=pltpu.CompilerParams(
            dimension_semantics=("parallel",)),
    )(x_p, w1_2d, b1_2d, w2_2d, b2_2d, masks, pool)

    # Free reshape back to the PyTorch NCHW pooled layout.
    out = out_flat.reshape(Cout, B, H // 2, W // 2)
    return jnp.transpose(out, (1, 0, 2, 3))


def _reference(x_nchw, w1_oihw, b1, w2_oihw, b2):
    """Pure-JAX reference (lax conv, NCHW/OIHW like PyTorch), exact f32."""
    dn = ("NCHW", "OIHW", "NCHW")
    hp = jax.lax.Precision.HIGHEST
    y = jax.lax.conv_general_dilated(x_nchw, w1_oihw, (1, 1), "SAME",
                                     dimension_numbers=dn, precision=hp)
    y = jnp.maximum(y + b1[None, :, None, None], 0.0)
    y = jax.lax.conv_general_dilated(y, w2_oihw, (1, 1), "SAME",
                                     dimension_numbers=dn, precision=hp)
    y = jnp.maximum(y + b2[None, :, None, None], 0.0)
    y = jax.lax.reduce_window(y, -jnp.inf, jax.lax.max,
                              (1, 1, 2, 2), (1, 1, 2, 2), "VALID")
    return y


if __name__ == "__main__":
    B, in_channels, H, W = 2, 4, 16, 16
    hidden_units, out_channels = 8, 8

    key = jax.random.PRNGKey(0)
    kx, kw1, kb1, kw2, kb2 = jax.random.split(key, 5)

    x = jax.random.normal(kx, (B, in_channels, H, W), jnp.float32)
    # deterministic, PyTorch-like scaled uniform init (fan_in)
    fan1 = in_channels * 9
    fan2 = hidden_units * 9
    w1 = jax.random.uniform(kw1, (hidden_units, in_channels, 3, 3),
                            jnp.float32, -1.0, 1.0) / np.sqrt(fan1)
    b1 = jax.random.uniform(kb1, (hidden_units,), jnp.float32, -1.0, 1.0) / np.sqrt(fan1)
    w2 = jax.random.uniform(kw2, (out_channels, hidden_units, 3, 3),
                            jnp.float32, -1.0, 1.0) / np.sqrt(fan2)
    b2 = jax.random.uniform(kb2, (out_channels,), jnp.float32, -1.0, 1.0) / np.sqrt(fan2)

    out = jax.block_until_ready(basic_block(x, w1, b1, w2, b2))
    ref = jax.block_until_ready(_reference(x, w1, b1, w2, b2))

    # Tolerance covers the MXU's default f32 matmul precision (bf16 multi-pass
    # accumulation into f32); any structural / indexing bug would show up as
    # O(1) errors, so this remains a strict functional check.
    np.testing.assert_allclose(np.asarray(out), np.asarray(ref),
                               rtol=5e-3, atol=5e-3)
    assert out.shape == (B, out_channels, H // 2, W // 2)
    print("KERNEL_OK")
</pallas_src>

<mosaic_0001>
module attributes {stable_mosaic.version = 11 : i64} {
  func.func @_basic_block_kernel(%arg0: i32, %arg1: memref<8x512xf32, #tpu.memory_space<vmem>>, %arg2: memref<8x72xf32, #tpu.memory_space<vmem>>, %arg3: memref<8x1xf32, #tpu.memory_space<vmem>>, %arg4: memref<8x72xf32, #tpu.memory_space<vmem>>, %arg5: memref<8x1xf32, #tpu.memory_space<vmem>>, %arg6: memref<9x512xf32, #tpu.memory_space<vmem>>, %arg7: memref<512x128xf32, #tpu.memory_space<vmem>>, %arg8: memref<8x128xf32, #tpu.memory_space<vmem>>) attributes {dimension_semantics = [#tpu.dimension_semantics<parallel>], iteration_bounds = array<i64: 1>, scalar_prefetch = 0 : i64, scratch_operands = 0 : i64, tpu.core_type = #tpu.core_type<tc>, window_params = [{transform_indices = @transform_0, window_bounds = array<i64: 8, 512>}, {pipeline_mode = #tpu.pipeline_mode<synchronous>, transform_indices = @transform_1, window_bounds = array<i64: 8, 72>}, {pipeline_mode = #tpu.pipeline_mode<synchronous>, transform_indices = @transform_2, window_bounds = array<i64: 8, 1>}, {pipeline_mode = #tpu.pipeline_mode<synchronous>, transform_indices = @transform_3, window_bounds = array<i64: 8, 72>}, {pipeline_mode = #tpu.pipeline_mode<synchronous>, transform_indices = @transform_4, window_bounds = array<i64: 8, 1>}, {pipeline_mode = #tpu.pipeline_mode<synchronous>, transform_indices = @transform_5, window_bounds = array<i64: 9, 512>}, {pipeline_mode = #tpu.pipeline_mode<synchronous>, transform_indices = @transform_6, window_bounds = array<i64: 512, 128>}, {transform_indices = @transform_7, window_bounds = array<i64: 8, 128>}]} {
    %c0 = arith.constant 0 : index
    %c0_0 = arith.constant 0 : index
    %0 = vector.load %arg6[%c0, %c0_0] : memref<9x512xf32, #tpu.memory_space<vmem>>, vector<9x512xf32>
    %c0_1 = arith.constant 0 : index
    %c0_2 = arith.constant 0 : index
    %1 = vector.load %arg1[%c0_1, %c0_2] : memref<8x512xf32, #tpu.memory_space<vmem>>, vector<8x512xf32>
    %c0_3 = arith.constant 0 : index
    %c0_4 = arith.constant 0 : index
    %2 = vector.load %arg2[%c0_3, %c0_4] : memref<8x72xf32, #tpu.memory_space<vmem>>, vector<8x72xf32>
    %c0_5 = arith.constant 0 : index
    %c0_6 = arith.constant 0 : index
    %3 = vector.load %arg3[%c0_5, %c0_6] : memref<8x1xf32, #tpu.memory_space<vmem>>, vector<8x1xf32>
    %c17_i32 = arith.constant 17 : i32
    %4 = tpu.dynamic_rotate %1 by %c17_i32 dim 1 : vector<8x512xf32>, i32 -> vector<8x512xf32>
    %5 = vector.extract_strided_slice %0 {offsets = [0, 0], sizes = [1, 512], strides = [1, 1]} : vector<9x512xf32> to vector<1x512xf32>
    %6 = vector.broadcast %5 : vector<1x512xf32> to vector<8x512xf32>
    %7 = arith.mulf %4, %6 : vector<8x512xf32>
    %c16_i32 = arith.constant 16 : i32
    %8 = tpu.dynamic_rotate %1 by %c16_i32 dim 1 : vector<8x512xf32>, i32 -> vector<8x512xf32>
    %9 = vector.extract_strided_slice %0 {offsets = [1, 0], sizes = [1, 512], strides = [1, 1]} : vector<9x512xf32> to vector<1x512xf32>
    %10 = vector.broadcast %9 : vector<1x512xf32> to vector<8x512xf32>
    %11 = arith.mulf %8, %10 : vector<8x512xf32>
    %c15_i32 = arith.constant 15 : i32
    %12 = tpu.dynamic_rotate %1 by %c15_i32 dim 1 : vector<8x512xf32>, i32 -> vector<8x512xf32>
    %13 = vector.extract_strided_slice %0 {offsets = [2, 0], sizes = [1, 512], strides = [1, 1]} : vector<9x512xf32> to vector<1x512xf32>
    %14 = vector.broadcast %13 : vector<1x512xf32> to vector<8x512xf32>
    %15 = arith.mulf %12, %14 : vector<8x512xf32>
    %c1_i32 = arith.constant 1 : i32
    %16 = tpu.dynamic_rotate %1 by %c1_i32 dim 1 : vector<8x512xf32>, i32 -> vector<8x512xf32>
    %17 = vector.extract_strided_slice %0 {offsets = [3, 0], sizes = [1, 512], strides = [1, 1]} : vector<9x512xf32> to vector<1x512xf32>
    %18 = vector.broadcast %17 : vector<1x512xf32> to vector<8x512xf32>
    %19 = arith.mulf %16, %18 : vector<8x512xf32>
    %c511_i32 = arith.constant 511 : i32
    %20 = tpu.dynamic_rotate %1 by %c511_i32 dim 1 : vector<8x512xf32>, i32 -> vector<8x512xf32>
    %21 = vector.extract_strided_slice %0 {offsets = [5, 0], sizes = [1, 512], strides = [1, 1]} : vector<9x512xf32> to vector<1x512xf32>
    %22 = vector.broadcast %21 : vector<1x512xf32> to vector<8x512xf32>
    %23 = arith.mulf %20, %22 : vector<8x512xf32>
    %c497_i32 = arith.constant 497 : i32
    %24 = tpu.dynamic_rotate %1 by %c497_i32 dim 1 : vector<8x512xf32>, i32 -> vector<8x512xf32>
    %25 = vector.extract_strided_slice %0 {offsets = [6, 0], sizes = [1, 512], strides = [1, 1]} : vector<9x512xf32> to vector<1x512xf32>
    %26 = vector.broadcast %25 : vector<1x512xf32> to vector<8x512xf32>
    %27 = arith.mulf %24, %26 : vector<8x512xf32>
    %c496_i32 = arith.constant 496 : i32
    %28 = tpu.dynamic_rotate %1 by %c496_i32 dim 1 : vector<8x512xf32>, i32 -> vector<8x512xf32>
    %29 = vector.extract_strided_slice %0 {offsets = [7, 0], sizes = [1, 512], strides = [1, 1]} : vector<9x512xf32> to vector<1x512xf32>
    %30 = vector.broadcast %29 : vector<1x512xf32> to vector<8x512xf32>
    %31 = arith.mulf %28, %30 : vector<8x512xf32>
    %c495_i32 = arith.constant 495 : i32
    %32 = tpu.dynamic_rotate %1 by %c495_i32 dim 1 : vector<8x512xf32>, i32 -> vector<8x512xf32>
    %33 = vector.extract_strided_slice %0 {offsets = [8, 0], sizes = [1, 512], strides = [1, 1]} : vector<9x512xf32> to vector<1x512xf32>
    %34 = vector.broadcast %33 : vector<1x512xf32> to vector<8x512xf32>
    %35 = arith.mulf %32, %34 : vector<8x512xf32>
    %36 = tpu.concatenate %7, %11, %15, %19, %1, %23, %27, %31, %35 in 0 : vector<8x512xf32>, vector<8x512xf32>, vector<8x512xf32>, vector<8x512xf32>, vector<8x512xf32>, vector<8x512xf32>, vector<8x512xf32>, vector<8x512xf32>, vector<8x512xf32> -> vector<72x512xf32>
    %cst = arith.constant dense<0.000000e+00> : vector<8x512xf32>
    %37 = tpu.matmul %2, %36, %cst {dimension_numbers = #tpu.dot_dimension_numbers<[1], [0], [0], [1], [0, 0, 1, 1], [], []>} : vector<8x72xf32>, vector<72x512xf32>, vector<8x512xf32> -> vector<8x512xf32>
    %38 = vector.broadcast %3 : vector<8x1xf32> to vector<8x512xf32>
    %39 = arith.addf %37, %38 : vector<8x512xf32>
    %cst_7 = arith.constant 0.000000e+00 : f32
    %40 = vector.broadcast %cst_7 : f32 to vector<8x512xf32>
    %41 = arith.maximumf %39, %40 : vector<8x512xf32>
    %c0_8 = arith.constant 0 : index
    %c0_9 = arith.constant 0 : index
    %42 = vector.load %arg4[%c0_8, %c0_9] : memref<8x72xf32, #tpu.memory_space<vmem>>, vector<8x72xf32>
    %c0_10 = arith.constant 0 : index
    %c0_11 = arith.constant 0 : index
    %43 = vector.load %arg5[%c0_10, %c0_11] : memref<8x1xf32, #tpu.memory_space<vmem>>, vector<8x1xf32>
    %c17_i32_12 = arith.constant 17 : i32
    %44 = tpu.dynamic_rotate %41 by %c17_i32_12 dim 1 : vector<8x512xf32>, i32 -> vector<8x512xf32>
    %45 = vector.extract_strided_slice %0 {offsets = [0, 0], sizes = [1, 512], strides = [1, 1]} : vector<9x512xf32> to vector<1x512xf32>
    %46 = vector.broadcast %45 : vector<1x512xf32> to vector<8x512xf32>
    %47 = arith.mulf %44, %46 : vector<8x512xf32>
    %c16_i32_13 = arith.constant 16 : i32
    %48 = tpu.dynamic_rotate %41 by %c16_i32_13 dim 1 : vector<8x512xf32>, i32 -> vector<8x512xf32>
    %49 = vector.extract_strided_slice %0 {offsets = [1, 0], sizes = [1, 512], strides = [1, 1]} : vector<9x512xf32> to vector<1x512xf32>
    %50 = vector.broadcast %49 : vector<1x512xf32> to vector<8x512xf32>
    %51 = arith.mulf %48, %50 : vector<8x512xf32>
    %c15_i32_14 = arith.constant 15 : i32
    %52 = tpu.dynamic_rotate %41 by %c15_i32_14 dim 1 : vector<8x512xf32>, i32 -> vector<8x512xf32>
    %53 = vector.extract_strided_slice %0 {offsets = [2, 0], sizes = [1, 512], strides = [1, 1]} : vector<9x512xf32> to vector<1x512xf32>
    %54 = vector.broadcast %53 : vector<1x512xf32> to vector<8x512xf32>
    %55 = arith.mulf %52, %54 : vector<8x512xf32>
    %c1_i32_15 = arith.constant 1 : i32
    %56 = tpu.dynamic_rotate %41 by %c1_i32_15 dim 1 : vector<8x512xf32>, i32 -> vector<8x512xf32>
    %57 = vector.extract_strided_slice %0 {offsets = [3, 0], sizes = [1, 512], strides = [1, 1]} : vector<9x512xf32> to vector<1x512xf32>
    %58 = vector.broadcast %57 : vector<1x512xf32> to vector<8x512xf32>
    %59 = arith.mulf %56, %58 : vector<8x512xf32>
    %c511_i32_16 = arith.constant 511 : i32
    %60 = tpu.dynamic_rotate %41 by %c511_i32_16 dim 1 : vector<8x512xf32>, i32 -> vector<8x512xf32>
    %61 = vector.extract_strided_slice %0 {offsets = [5, 0], sizes = [1, 512], strides = [1, 1]} : vector<9x512xf32> to vector<1x512xf32>
    %62 = vector.broadcast %61 : vector<1x512xf32> to vector<8x512xf32>
    %63 = arith.mulf %60, %62 : vector<8x512xf32>
    %c497_i32_17 = arith.constant 497 : i32
    %64 = tpu.dynamic_rotate %41 by %c497_i32_17 dim 1 : vector<8x512xf32>, i32 -> vector<8x512xf32>
    %65 = vector.extract_strided_slice %0 {offsets = [6, 0], sizes = [1, 512], strides = [1, 1]} : vector<9x512xf32> to vector<1x512xf32>
    %66 = vector.broadcast %65 : vector<1x512xf32> to vector<8x512xf32>
    %67 = arith.mulf %64, %66 : vector<8x512xf32>
    %c496_i32_18 = arith.constant 496 : i32
    %68 = tpu.dynamic_rotate %41 by %c496_i32_18 dim 1 : vector<8x512xf32>, i32 -> vector<8x512xf32>
    %69 = vector.extract_strided_slice %0 {offsets = [7, 0], sizes = [1, 512], strides = [1, 1]} : vector<9x512xf32> to vector<1x512xf32>
    %70 = vector.broadcast %69 : vector<1x512xf32> to vector<8x512xf32>
    %71 = arith.mulf %68, %70 : vector<8x512xf32>
    %c495_i32_19 = arith.constant 495 : i32
    %72 = tpu.dynamic_rotate %41 by %c495_i32_19 dim 1 : vector<8x512xf32>, i32 -> vector<8x512xf32>
    %73 = vector.extract_strided_slice %0 {offsets = [8, 0], sizes = [1, 512], strides = [1, 1]} : vector<9x512xf32> to vector<1x512xf32>
    %74 = vector.broadcast %73 : vector<1x512xf32> to vector<8x512xf32>
    %75 = arith.mulf %72, %74 : vector<8x512xf32>
    %76 = tpu.concatenate %47, %51, %55, %59, %41, %63, %67, %71, %75 in 0 : vector<8x512xf32>, vector<8x512xf32>, vector<8x512xf32>, vector<8x512xf32>, vector<8x512xf32>, vector<8x512xf32>, vector<8x512xf32>, vector<8x512xf32>, vector<8x512xf32> -> vector<72x512xf32>
    %cst_20 = arith.constant dense<0.000000e+00> : vector<8x512xf32>
    %77 = tpu.matmul %42, %76, %cst_20 {dimension_numbers = #tpu.dot_dimension_numbers<[1], [0], [0], [1], [0, 0, 1, 1], [], []>} : vector<8x72xf32>, vector<72x512xf32>, vector<8x512xf32> -> vector<8x512xf32>
    %78 = vector.broadcast %43 : vector<8x1xf32> to vector<8x512xf32>
    %79 = arith.addf %77, %78 : vector<8x512xf32>
    %cst_21 = arith.constant 0.000000e+00 : f32
    %80 = vector.broadcast %cst_21 : f32 to vector<8x512xf32>
    %81 = arith.maximumf %79, %80 : vector<8x512xf32>
    %c511_i32_22 = arith.constant 511 : i32
    %82 = tpu.dynamic_rotate %81 by %c511_i32_22 dim 1 : vector<8x512xf32>, i32 -> vector<8x512xf32>
    %83 = arith.maximumf %81, %82 : vector<8x512xf32>
    %c496_i32_23 = arith.constant 496 : i32
    %84 = tpu.dynamic_rotate %83 by %c496_i32_23 dim 1 : vector<8x512xf32>, i32 -> vector<8x512xf32>
    %85 = arith.maximumf %83, %84 : vector<8x512xf32>
    %c0_24 = arith.constant 0 : index
    %c0_25 = arith.constant 0 : index
    %86 = vector.load %arg7[%c0_24, %c0_25] : memref<512x128xf32, #tpu.memory_space<vmem>>, vector<512x128xf32>
    %cst_26 = arith.constant dense<0.000000e+00> : vector<8x128xf32>
    %87 = tpu.matmul %85, %86, %cst_26 {dimension_numbers = #tpu.dot_dimension_numbers<[1], [0], [0], [1], [0, 0, 1, 1], [], []>} : vector<8x512xf32>, vector<512x128xf32>, vector<8x128xf32> -> vector<8x128xf32>
    %c0_27 = arith.constant 0 : index
    %c0_28 = arith.constant 0 : index
    %88 = vector.load %arg8[%c0_27, %c0_28] : memref<8x128xf32, #tpu.memory_space<vmem>>, vector<8x128xf32>
    tpu.vector_store %arg8[%c0_27, %c0_28], %87 {strides = array<i32>} : memref<8x128xf32, #tpu.memory_space<vmem>>, vector<8x128xf32>,
    return
  }
  func.func @transform_0(%arg0: i32) -> (i32, i32) {
    %c0_i32 = arith.constant 0 : i32
    %c0_i32_0 = arith.constant 0 : i32
    return %c0_i32, %arg0 : i32, i32
  }
  func.func @transform_1(%arg0: i32) -> (i32, i32) {
    %c0_i32 = arith.constant 0 : i32
    %c0_i32_0 = arith.constant 0 : i32
    %c0_i32_1 = arith.constant 0 : i32
    return %c0_i32, %c0_i32_0 : i32, i32
  }
  func.func @transform_2(%arg0: i32) -> (i32, i32) {
    %c0_i32 = arith.constant 0 : i32
    %c0_i32_0 = arith.constant 0 : i32
    %c0_i32_1 = arith.constant 0 : i32
    return %c0_i32, %c0_i32_0 : i32, i32
  }
  func.func @transform_3(%arg0: i32) -> (i32, i32) {
    %c0_i32 = arith.constant 0 : i32
    %c0_i32_0 = arith.constant 0 : i32
    %c0_i32_1 = arith.constant 0 : i32
    return %c0_i32, %c0_i32_0 : i32, i32
  }
  func.func @transform_4(%arg0: i32) -> (i32, i32) {
    %c0_i32 = arith.constant 0 : i32
    %c0_i32_0 = arith.constant 0 : i32
    %c0_i32_1 = arith.constant 0 : i32
    return %c0_i32, %c0_i32_0 : i32, i32
  }
  func.func @transform_5(%arg0: i32) -> (i32, i32) {
    %c0_i32 = arith.constant 0 : i32
    %c0_i32_0 = arith.constant 0 : i32
    %c0_i32_1 = arith.constant 0 : i32
    return %c0_i32, %c0_i32_0 : i32, i32
  }
  func.func @transform_6(%arg0: i32) -> (i32, i32) {
    %c0_i32 = arith.constant 0 : i32
    %c0_i32_0 = arith.constant 0 : i32
    %c0_i32_1 = arith.constant 0 : i32
    return %c0_i32, %c0_i32_0 : i32, i32
  }
  func.func @transform_7(%arg0: i32) -> (i32, i32) {
    %c0_i32 = arith.constant 0 : i32
    %c0_i32_0 = arith.constant 0 : i32
    return %c0_i32, %arg0 : i32, i32
  }
}

</mosaic_0001>

<llo_original>
// kernel: tpu_custom_call.1
$region0: #{tpu_custom_call.1}
  #allocation0 [shape = 'u32[]', space=smem, size = 0x4, offset = 0x4, fixed_abs, tag = 'smem constant byte address 0x4 - core index']
  #allocation1 [shape = 'u32[72,128]{1,0:T(1,128)}', space=vmem, size = 0x9000, scoped, tag = 'internal scratch']
  %s0 = inlined_call_operand.hbm [shape: f32[8,512], index: 0, kind: input, shape index: {}]
  %s1 = inlined_call_operand.vmem [shape: f32[8,72], index: 1, kind: input, shape index: {}]
  %s2 = inlined_call_operand.vmem [shape: f32[8,1], index: 2, kind: input, shape index: {}]
  %s3 = inlined_call_operand.vmem [shape: f32[8,72], index: 3, kind: input, shape index: {}]
  %s4 = inlined_call_operand.vmem [shape: f32[8,1], index: 4, kind: input, shape index: {}]
  %s5 = inlined_call_operand.hbm [shape: f32[9,512], index: 5, kind: input, shape index: {}]
  %s6 = inlined_call_operand.hbm [shape: f32[512,128], index: 6, kind: input, shape index: {}]
  %s7 = inlined_call_operand.hbm [shape: f32[8,128], index: 7, kind: output, shape index: {}]
  %s8 = sld [smem:[#allocation0]]
  $region50: #{tpu_custom_call.1} parent=0
    _
  %s10 = ssub.s32 1, %s8
  %s11 = scalar_select 0, %s10, %s8
  $region1: #{tpu_custom_call.1} parent=0
    #allocation2 [shape = 'u8[16384]{0}', space=vmem, size = 0x4000, scoped, tag = 'input window, operand 0, single buffered']
    #allocation3 [shape = 's32[1]{0}', space=sflag, size = 0x4, scoped, tag = 'scoped memory for tpu_custom_call.1']
    #allocation4 [shape = 's32[1]{0}', space=sflag, size = 0x4, scoped, tag = 'scoped memory for tpu_custom_call.1']
    #allocation5 [shape = 'u8[32768]{0}', space=vmem, size = 0x8000, scoped, tag = 'input window, operand 5, single buffered']
    #allocation6 [shape = 's32[1]{0}', space=sflag, size = 0x4, scoped, tag = 'scoped memory for tpu_custom_call.1']
    #allocation7 [shape = 'u8[262144]{0}', space=vmem, size = 0x40000, scoped, tag = 'input window, operand 6, single buffered']
    #allocation8 [shape = 'u8[4096]{0}', space=vmem, size = 0x1000, scoped, tag = 'output window, operand 0, single buffered']
    %12 = vsyncpa [#allocation3], 0
    %13 = vsyncpa [#allocation6], 0
    %14 = vsyncpa [#allocation4], 0
    // Predicated region
    $region2: #{tpu_custom_call.1} parent=1 // pred_check
      _
    $region3: #{tpu_custom_call.1} parent=1 // pred_check_branch
      %16 = sbr.rel (0) target = $region5
    $region4: #{tpu_custom_call.1} parent=1 // pred_region
      %18 = vsyncadd [#allocation3], 0
      %s20 = sshll.u32 %s0, 4
      %s21 = int_to_ptr.hbm [resolvable:$true] %s20
      %s22 = sshll.u32 [#allocation2], 4
      %s23 = int_to_ptr.vmem [resolvable:$true] %s22
      %25 = dma.hbm_to_vmem [thread:$0]  %s21, 512, %s23, [#allocation3]
    $region5: #{tpu_custom_call.1} parent=1 // pred_fallthru
      _
    // Predicated region
    $region6: #{tpu_custom_call.1} parent=1 // pred_check
      _
    $region7: #{tpu_custom_call.1} parent=1 // pred_check_branch
      %27 = sbr.rel (0) target = $region9
    $region8: #{tpu_custom_call.1} parent=1 // pred_region
      _
    $region9: #{tpu_custom_call.1} parent=1 // pred_fallthru
      _
    // Predicated region
    $region10: #{tpu_custom_call.1} parent=1 // pred_check
      _
    $region11: #{tpu_custom_call.1} parent=1 // pred_check_branch
      %29 = sbr.rel (0) target = $region13
    $region12: #{tpu_custom_call.1} parent=1 // pred_region
      _
    $region13: #{tpu_custom_call.1} parent=1 // pred_fallthru
      _
    // Predicated region
    $region14: #{tpu_custom_call.1} parent=1 // pred_check
      _
    $region15: #{tpu_custom_call.1} parent=1 // pred_check_branch
      %31 = sbr.rel (0) target = $region17
    $region16: #{tpu_custom_call.1} parent=1 // pred_region
      _
    $region17: #{tpu_custom_call.1} parent=1 // pred_fallthru
      _
    // Predicated region
    $region18: #{tpu_custom_call.1} parent=1 // pred_check
      _
    $region19: #{tpu_custom_call.1} parent=1 // pred_check_branch
      %33 = sbr.rel (0) target = $region21
    $region20: #{tpu_custom_call.1} parent=1 // pred_region
      _
    $region21: #{tpu_custom_call.1} parent=1 // pred_fallthru
      _
    // Predicated region
    $region22: #{tpu_custom_call.1} parent=1 // pred_check
      _
    $region23: #{tpu_custom_call.1} parent=1 // pred_check_branch
      %35 = sbr.rel (0) target = $region25
    $region24: #{tpu_custom_call.1} parent=1 // pred_region
      %37 = vsyncadd [#allocation6], 0
      %s38 = sshll.u32 %s5, 4
      %s39 = int_to_ptr.hbm [resolvable:$true] %s38
      %s40 = sshll.u32 [#allocation5], 4
      %s41 = int_to_ptr.vmem [resolvable:$true] %s40
      %46 = dma.hbm_to_vmem [thread:$0]  %s39, 1024, %s41, [#allocation6], 512, 512, 32
    $region25: #{tpu_custom_call.1} parent=1 // pred_fallthru
      _
    // Predicated region
    $region26: #{tpu_custom_call.1} parent=1 // pred_check
      _
    $region27: #{tpu_custom_call.1} parent=1 // pred_check_branch
      %48 = sbr.rel (0) target = $region29
    $region28: #{tpu_custom_call.1} parent=1 // pred_region
      %50 = vsyncadd [#allocation6], 0
      %s51 = sshll.u32 %s6, 4
      %s52 = int_to_ptr.hbm [resolvable:$true] %s51
      %s53 = sshll.u32 [#allocation7], 4
      %s54 = int_to_ptr.vmem [resolvable:$true] %s53
      %59 = dma.hbm_to_vmem [thread:$0]  %s52, 8192, %s54, [#allocation6], 128, 128, 8
    $region29: #{tpu_custom_call.1} parent=1 // pred_fallthru
      _
    // Predicated region
    $region30: #{tpu_custom_call.1} parent=1 // pred_check
      _
    $region31: #{tpu_custom_call.1} parent=1 // pred_check_branch
      %61 = sbr.rel (0) target = $region33
    $region32: #{tpu_custom_call.1} parent=1 // pred_region
      %63 = dma.done [#allocation3], 512
    $region33: #{tpu_custom_call.1} parent=1 // pred_fallthru
      _
    // Predicated region
    $region34: #{tpu_custom_call.1} parent=1 // pred_check
      _
    $region35: #{tpu_custom_call.1} parent=1 // pred_check_branch
      %65 = sbr.rel (0) target = $region37
    $region36: #{tpu_custom_call.1} parent=1 // pred_region
      %67 = dma.done [#allocation6], 1024
    $region37: #{tpu_custom_call.1} parent=1 // pred_fallthru
      _
    // Predicated region
    $region38: #{tpu_custom_call.1} parent=1 // pred_check
      _
    $region39: #{tpu_custom_call.1} parent=1 // pred_check_branch
      %69 = sbr.rel (0) target = $region41
    $region40: #{tpu_custom_call.1} parent=1 // pred_region
      %71 = dma.done [#allocation6], 8192
    $region41: #{tpu_custom_call.1} parent=1 // pred_fallthru
      _
    %v72 = vld [vmem:[#allocation5] sm:$0xff]
    %v73 = vld [vmem:[#allocation5 + $0x8] sm:$0xff]
    %v74 = vld [vmem:[#allocation5 + $0x10] sm:$0xff]
    %v75 = vld [vmem:[#allocation5 + $0x18] sm:$0xff]
    %v76 = vld [vmem:[#allocation5 + $0x20] sm:$0x1]
    %v77 = vld [vmem:[#allocation5 + $0x28] sm:$0x1]
    %v78 = vld [vmem:[#allocation5 + $0x30] sm:$0x1]
    %v79 = vld [vmem:[#allocation5 + $0x38] sm:$0x1]
    %v80 = vld [vmem:[#allocation2] sm:$0xff]
    %v81 = vld [vmem:[#allocation2 + $0x8] sm:$0xff]
    %v82 = vld [vmem:[#allocation2 + $0x10] sm:$0xff]
    %v83 = vld [vmem:[#allocation2 + $0x18] sm:$0xff]
    %v84 = vld [vmem:[%s1] sm:$0xff]
    %v85 = vld [vmem:[%s2] sm:$0xff]
    %86 = vrot.lane.b32.xlu0 %v80, 17
    %v87 = vpop.permute.xlu0 %86
    %88 = vrot.lane.b32.xlu0 %v81, 17
    %v89 = vpop.permute.xlu0 %88
    %90 = vrot.lane.b32.xlu0 %v82, 17
    %v91 = vpop.permute.xlu0 %90
    %92 = vrot.lane.b32.xlu0 %v83, 17
    %v93 = vpop.permute.xlu0 %92
    %v94 = vlaneseq
    %v95 = vand.u32 %v94, 127
    %vm96 = vcmp.lt.s32.totalorder %v95, 17
    %v97 = vsel %vm96, %v91, %v93
    %v98 = vsel %vm96, %v89, %v91
    %v99 = vsel %vm96, %v87, %v89
    %v100 = vsel %vm96, %v93, %v87
    %v101 = vperm.slane %v72, 0
    %v102 = vperm.slane %v73, 0
    %v103 = vperm.slane %v74, 0
    %v104 = vperm.slane %v75, 0
    %v105 = vmul.f32 %v100, %v101
    %v106 = vmul.f32 %v99, %v102
    %v107 = vmul.f32 %v98, %v103
    %v108 = vmul.f32 %v97, %v104
    %109 = vrot.lane.b32.xlu0 %v80, 16
    %v110 = vpop.permute.xlu0 %109
    %111 = vrot.lane.b32.xlu0 %v81, 16
    %v112 = vpop.permute.xlu0 %111
    %113 = vrot.lane.b32.xlu0 %v82, 16
    %v114 = vpop.permute.xlu0 %113
    %115 = vrot.lane.b32.xlu0 %v83, 16
    %v116 = vpop.permute.xlu0 %115
    %vm117 = vcmp.lt.s32.totalorder %v95, 16
    %v118 = vsel %vm117, %v114, %v116
    %v119 = vsel %vm117, %v112, %v114
    %v120 = vsel %vm117, %v110, %v112
    %v121 = vsel %vm117, %v116, %v110
    %v122 = vperm.slane %v72, 1
    %v123 = vperm.slane %v73, 1
    %v124 = vperm.slane %v74, 1
    %v125 = vperm.slane %v75, 1
    %v126 = vmul.f32 %v121, %v122
    %v127 = vmul.f32 %v120, %v123
    %v128 = vmul.f32 %v119, %v124
    %v129 = vmul.f32 %v118, %v125
    %130 = vrot.lane.b32.xlu0 %v80, 15
    %v131 = vpop.permute.xlu0 %130
    %132 = vrot.lane.b32.xlu0 %v81, 15
    %v133 = vpop.permute.xlu0 %132
    %134 = vrot.lane.b32.xlu0 %v82, 15
    %v135 = vpop.permute.xlu0 %134
    %136 = vrot.lane.b32.xlu0 %v83, 15
    %v137 = vpop.permute.xlu0 %136
    %vm138 = vcmp.lt.s32.totalorder %v95, 15
    %v139 = vsel %vm138, %v135, %v137
    %v140 = vsel %vm138, %v133, %v135
    %v141 = vsel %vm138, %v131, %v133
    %v142 = vsel %vm138, %v137, %v131
    %v143 = vperm.slane %v72, 2
    %v144 = vperm.slane %v73, 2
    %v145 = vperm.slane %v74, 2
    %v146 = vperm.slane %v75, 2
    %v147 = vmul.f32 %v142, %v143
    %v148 = vmul.f32 %v141, %v144
    %v149 = vmul.f32 %v140, %v145
    %v150 = vmul.f32 %v139, %v146
    %151 = vrot.lane.b32.xlu0 %v80, 1
    %v152 = vpop.permute.xlu0 %151
    %153 = vrot.lane.b32.xlu0 %v81, 1
    %v154 = vpop.permute.xlu0 %153
    %155 = vrot.lane.b32.xlu0 %v82, 1
    %v156 = vpop.permute.xlu0 %155
    %157 = vrot.lane.b32.xlu0 %v83, 1
    %v158 = vpop.permute.xlu0 %157
    %vm159 = vcmp.lt.s32.totalorder %v95, 1
    %v160 = vsel %vm159, %v156, %v158
    %v161 = vsel %vm159, %v154, %v156
    %v162 = vsel %vm159, %v152, %v154
    %v163 = vsel %vm159, %v158, %v152
    %v164 = vperm.slane %v72, 3
    %v165 = vperm.slane %v73, 3
    %v166 = vperm.slane %v74, 3
    %v167 = vperm.slane %v75, 3
    %v168 = vmul.f32 %v163, %v164
    %v169 = vmul.f32 %v162, %v165
    %v170 = vmul.f32 %v161, %v166
    %v171 = vmul.f32 %v160, %v167
    %172 = vrot.lane.b32.xlu0 %v80, 127
    %v173 = vpop.permute.xlu0 %172
    %174 = vrot.lane.b32.xlu0 %v81, 127
    %v175 = vpop.permute.xlu0 %174
    %176 = vrot.lane.b32.xlu0 %v82, 127
    %v177 = vpop.permute.xlu0 %176
    %178 = vrot.lane.b32.xlu0 %v83, 127
    %v179 = vpop.permute.xlu0 %178
    %vm180 = vcmp.lt.s32.totalorder %v95, 127
    %v181 = vsel %vm180, %v177, %v179
    %v182 = vsel %vm180, %v175, %v177
    %v183 = vsel %vm180, %v173, %v175
    %v184 = vsel %vm180, %v179, %v173
    %v185 = vperm.slane %v72, 5
    %v186 = vperm.slane %v73, 5
    %v187 = vperm.slane %v74, 5
    %v188 = vperm.slane %v75, 5
    %v189 = vmul.f32 %v183, %v185
    %v190 = vmul.f32 %v182, %v186
    %v191 = vmul.f32 %v181, %v187
    %v192 = vmul.f32 %v184, %v188
    %193 = vrot.lane.b32.xlu0 %v80, 113
    %v194 = vpop.permute.xlu0 %193
    %195 = vrot.lane.b32.xlu0 %v81, 113
    %v196 = vpop.permute.xlu0 %195
    %197 = vrot.lane.b32.xlu0 %v82, 113
    %v198 = vpop.permute.xlu0 %197
    %199 = vrot.lane.b32.xlu0 %v83, 113
    %v200 = vpop.permute.xlu0 %199
    %vm201 = vcmp.lt.s32.totalorder %v95, 113
    %v202 = vsel %vm201, %v198, %v200
    %v203 = vsel %vm201, %v196, %v198
    %v204 = vsel %vm201, %v194, %v196
    %v205 = vsel %vm201, %v200, %v194
    %v206 = vperm.slane %v72, 6
    %v207 = vperm.slane %v73, 6
    %v208 = vperm.slane %v74, 6
    %v209 = vperm.slane %v75, 6
    %v210 = vmul.f32 %v204, %v206
    %v211 = vmul.f32 %v203, %v207
    %v212 = vmul.f32 %v202, %v208
    %v213 = vmul.f32 %v205, %v209
    %214 = vrot.lane.b32.xlu0 %v80, 112
    %v215 = vpop.permute.xlu0 %214
    %216 = vrot.lane.b32.xlu0 %v81, 112
    %v217 = vpop.permute.xlu0 %216
    %218 = vrot.lane.b32.xlu0 %v82, 112
    %v219 = vpop.permute.xlu0 %218
    %220 = vrot.lane.b32.xlu0 %v83, 112
    %v221 = vpop.permute.xlu0 %220
    %vm222 = vcmp.lt.s32.totalorder %v95, 112
    %v223 = vsel %vm222, %v219, %v221
    %v224 = vsel %vm222, %v217, %v219
    %v225 = vsel %vm222, %v215, %v217
    %v226 = vsel %vm222, %v221, %v215
    %v227 = vperm.slane %v72, 7
    %v228 = vperm.slane %v73, 7
    %v229 = vperm.slane %v74, 7
    %v230 = vperm.slane %v75, 7
    %v231 = vmul.f32 %v225, %v227
    %v232 = vmul.f32 %v224, %v228
    %v233 = vmul.f32 %v223, %v229
    %v234 = vmul.f32 %v226, %v230
    %235 = vrot.lane.b32.xlu0 %v80, 111
    %v236 = vpop.permute.xlu0 %235
    %237 = vrot.lane.b32.xlu0 %v81, 111
    %v238 = vpop.permute.xlu0 %237
    %239 = vrot.lane.b32.xlu0 %v82, 111
    %v240 = vpop.permute.xlu0 %239
    %241 = vrot.lane.b32.xlu0 %v83, 111
    %v242 = vpop.permute.xlu0 %241
    %vm243 = vcmp.lt.s32.totalorder %v95, 111
    %v244 = vsel %vm243, %v240, %v242
    %v245 = vsel %vm243, %v238, %v240
    %v246 = vsel %vm243, %v236, %v238
    %v247 = vsel %vm243, %v242, %v236
    %v248 = vperm.slane %v76, 0
    %v249 = vperm.slane %v77, 0
    %v250 = vperm.slane %v78, 0
    %v251 = vperm.slane %v79, 0
    %v252 = vmul.f32 %v246, %v248
    %v253 = vmul.f32 %v245, %v249
    %v254 = vmul.f32 %v244, %v250
    %v255 = vmul.f32 %v247, %v251
    %257 = vset.pattern.permute.xlu0 0
    %258 = vperm.xlu0 %257, %v85
    %v259 = vpop.permute.xlu0 %258
    %vm261 = vcmask 588800
    %v263 = vsel %vm261, %v84, 0
    %265 = vmatpush.msra.mxu0 0.0
    %266 = vmatpush.msra.mxu0 0.0
    %267 = vmatpush.msra.mxu0 0.0
    %268 = vmatpush.msra.mxu0 0.0
    %269 = vmatpush.msra.mxu0 0.0
    %270 = vmatpush.msra.mxu0 0.0
    %271 = vmatpush.msra.mxu0 0.0
    %272 = vmatpush.msra.mxu0 %v252
    %273 = vmatpush.msra.mxu0 %v231
    %274 = vmatpush.msra.mxu0 %v210
    %275 = vmatpush.msra.mxu0 %v189
    %276 = vmatpush.msra.mxu0 %v80
    %277 = vmatpush.msra.mxu0 %v168
    %278 = vmatpush.msra.mxu0 %v147
    %279 = vmatpush.msra.mxu0 %v126
    %280 = vmatpush.msra.mxu0 %v105
    %281 = vmatmul.f32.gmra.mxu0 %v263
    %v282 = vpop.f32.mrf.mxu0
    %v283 = vadd.f32 %v259, %v282
    %284 = vdwg.mxu0
    %285 = vmatpush.msra.mxu0 0.0
    %286 = vmatpush.msra.mxu0 0.0
    %287 = vmatpush.msra.mxu0 0.0
    %288 = vmatpush.msra.mxu0 0.0
    %289 = vmatpush.msra.mxu0 0.0
    %290 = vmatpush.msra.mxu0 0.0
    %291 = vmatpush.msra.mxu0 0.0
    %292 = vmatpush.msra.mxu0 %v253
    %293 = vmatpush.msra.mxu0 %v232
    %294 = vmatpush.msra.mxu0 %v211
    %295 = vmatpush.msra.mxu0 %v190
    %296 = vmatpush.msra.mxu0 %v81
    %297 = vmatpush.msra.mxu0 %v169
    %298 = vmatpush.msra.mxu0 %v148
    %299 = vmatpush.msra.mxu0 %v127
    %300 = vmatpush.msra.mxu0 %v106
    %301 = vmatmul.f32.gmra.mxu0 %v263
    %v302 = vpop.f32.mrf.mxu0
    %v303 = vadd.f32 %v259, %v302
    %304 = vdwg.mxu0
    %305 = vmatpush.msra.mxu0 0.0
    %306 = vmatpush.msra.mxu0 0.0
    %307 = vmatpush.msra.mxu0 0.0
    %308 = vmatpush.msra.mxu0 0.0
    %309 = vmatpush.msra.mxu0 0.0
    %310 = vmatpush.msra.mxu0 0.0
    %311 = vmatpush.msra.mxu0 0.0
    %312 = vmatpush.msra.mxu0 %v254
    %313 = vmatpush.msra.mxu0 %v233
    %314 = vmatpush.msra.mxu0 %v212
    %315 = vmatpush.msra.mxu0 %v191
    %316 = vmatpush.msra.mxu0 %v82
    %317 = vmatpush.msra.mxu0 %v170
    %318 = vmatpush.msra.mxu0 %v149
    %319 = vmatpush.msra.mxu0 %v128
    %320 = vmatpush.msra.mxu0 %v107
    %321 = vmatmul.f32.gmra.mxu0 %v263
    %v322 = vpop.f32.mrf.mxu0
    %v323 = vadd.f32 %v259, %v322
    %324 = vdwg.mxu0
    %325 = vmatpush.msra.mxu0 0.0
    %326 = vmatpush.msra.mxu0 0.0
    %327 = vmatpush.msra.mxu0 0.0
    %328 = vmatpush.msra.mxu0 0.0
    %329 = vmatpush.msra.mxu0 0.0
    %330 = vmatpush.msra.mxu0 0.0
    %331 = vmatpush.msra.mxu0 0.0
    %332 = vmatpush.msra.mxu0 %v255
    %333 = vmatpush.msra.mxu0 %v234
    %334 = vmatpush.msra.mxu0 %v213
    %335 = vmatpush.msra.mxu0 %v192
    %336 = vmatpush.msra.mxu0 %v83
    %337 = vmatpush.msra.mxu0 %v171
    %338 = vmatpush.msra.mxu0 %v150
    %339 = vmatpush.msra.mxu0 %v129
    %340 = vmatpush.msra.mxu0 %v108
    %341 = vmatmul.f32.gmra.mxu0 %v263
    %v342 = vpop.f32.mrf.mxu0
    %v343 = vadd.f32 %v259, %v342
    %344 = vdwg.mxu0
    %v345 = vmax.f32 %v283, 0.0
    %v346 = vmax.f32 %v303, 0.0
    %v347 = vmax.f32 %v323, 0.0
    %v348 = vmax.f32 %v343, 0.0
    %v349 = vld [vmem:[%s3] sm:$0xff]
    %v350 = vld [vmem:[%s4] sm:$0xff]
    %351 = vrot.lane.b32.xlu0 %v345, 17
    %v352 = vpop.permute.xlu0 %351
    %353 = vrot.lane.b32.xlu0 %v346, 17
    %v354 = vpop.permute.xlu0 %353
    %355 = vrot.lane.b32.xlu0 %v347, 17
    %v356 = vpop.permute.xlu0 %355
    %357 = vrot.lane.b32.xlu0 %v348, 17
    %v358 = vpop.permute.xlu0 %357
    %v359 = vsel %vm96, %v356, %v358
    %v360 = vsel %vm96, %v354, %v356
    %v361 = vsel %vm96, %v352, %v354
    %v362 = vsel %vm96, %v358, %v352
    %v363 = vmul.f32 %v362, %v101
    %v364 = vmul.f32 %v361, %v102
    %v365 = vmul.f32 %v360, %v103
    %v366 = vmul.f32 %v359, %v104
    %367 = vrot.lane.b32.xlu0 %v345, 16
    %v368 = vpop.permute.xlu0 %367
    %369 = vrot.lane.b32.xlu0 %v346, 16
    %v370 = vpop.permute.xlu0 %369
    %371 = vrot.lane.b32.xlu0 %v347, 16
    %v372 = vpop.permute.xlu0 %371
    %373 = vrot.lane.b32.xlu0 %v348, 16
    %v374 = vpop.permute.xlu0 %373
    %v375 = vsel %vm117, %v372, %v374
    %v376 = vsel %vm117, %v370, %v372
    %v377 = vsel %vm117, %v368, %v370
    %v378 = vsel %vm117, %v374, %v368
    %v379 = vmul.f32 %v378, %v122
    %v380 = vmul.f32 %v377, %v123
    %v381 = vmul.f32 %v376, %v124
    %v382 = vmul.f32 %v375, %v125
    %383 = vrot.lane.b32.xlu0 %v345, 15
    %v384 = vpop.permute.xlu0 %383
    %385 = vrot.lane.b32.xlu0 %v346, 15
    %v386 = vpop.permute.xlu0 %385
    %387 = vrot.lane.b32.xlu0 %v347, 15
    %v388 = vpop.permute.xlu0 %387
    %389 = vrot.lane.b32.xlu0 %v348, 15
    %v390 = vpop.permute.xlu0 %389
    %v391 = vsel %vm138, %v388, %v390
    %v392 = vsel %vm138, %v386, %v388
    %v393 = vsel %vm138, %v384, %v386
    %v394 = vsel %vm138, %v390, %v384
    %v395 = vmul.f32 %v394, %v143
    %v396 = vmul.f32 %v393, %v144
    %v397 = vmul.f32 %v392, %v145
    %v398 = vmul.f32 %v391, %v146
    %399 = vrot.lane.b32.xlu0 %v345, 1
    %v400 = vpop.permute.xlu0 %399
    %401 = vrot.lane.b32.xlu0 %v346, 1
    %v402 = vpop.permute.xlu0 %401
    %403 = vrot.lane.b32.xlu0 %v347, 1
    %v404 = vpop.permute.xlu0 %403
    %405 = vrot.lane.b32.xlu0 %v348, 1
    %v406 = vpop.permute.xlu0 %405
    %v407 = vsel %vm159, %v404, %v406
    %v408 = vsel %vm159, %v402, %v404
    %v409 = vsel %vm159, %v400, %v402
    %v410 = vsel %vm159, %v406, %v400
    %v411 = vmul.f32 %v410, %v164
    %v412 = vmul.f32 %v409, %v165
    %v413 = vmul.f32 %v408, %v166
    %v414 = vmul.f32 %v407, %v167
    %415 = vrot.lane.b32.xlu0 %v345, 127
    %v416 = vpop.permute.xlu0 %415
    %417 = vrot.lane.b32.xlu0 %v346, 127
    %v418 = vpop.permute.xlu0 %417
    %419 = vrot.lane.b32.xlu0 %v347, 127
    %v420 = vpop.permute.xlu0 %419
    %421 = vrot.lane.b32.xlu0 %v348, 127
    %v422 = vpop.permute.xlu0 %421
    %v423 = vsel %vm180, %v420, %v422
    %v424 = vsel %vm180, %v418, %v420
    %v425 = vsel %vm180, %v416, %v418
    %v426 = vsel %vm180, %v422, %v416
    %v427 = vmul.f32 %v425, %v185
    %v428 = vmul.f32 %v424, %v186
    %v429 = vmul.f32 %v423, %v187
    %v430 = vmul.f32 %v426, %v188
    %431 = vrot.lane.b32.xlu0 %v345, 113
    %v432 = vpop.permute.xlu0 %431
    %433 = vrot.lane.b32.xlu0 %v346, 113
    %v434 = vpop.permute.xlu0 %433
    %435 = vrot.lane.b32.xlu0 %v347, 113
    %v436 = vpop.permute.xlu0 %435
    %437 = vrot.lane.b32.xlu0 %v348, 113
    %v438 = vpop.permute.xlu0 %437
    %v439 = vsel %vm201, %v436, %v438
    %v440 = vsel %vm201, %v434, %v436
    %v441 = vsel %vm201, %v432, %v434
    %v442 = vsel %vm201, %v438, %v432
    %v443 = vmul.f32 %v441, %v206
    %v444 = vmul.f32 %v440, %v207
    %v445 = vmul.f32 %v439, %v208
    %v446 = vmul.f32 %v442, %v209
    %447 = vrot.lane.b32.xlu0 %v345, 112
    %v448 = vpop.permute.xlu0 %447
    %449 = vrot.lane.b32.xlu0 %v346, 112
    %v450 = vpop.permute.xlu0 %449
    %451 = vrot.lane.b32.xlu0 %v347, 112
    %v452 = vpop.permute.xlu0 %451
    %453 = vrot.lane.b32.xlu0 %v348, 112
    %v454 = vpop.permute.xlu0 %453
    %v455 = vsel %vm222, %v452, %v454
    %v456 = vsel %vm222, %v450, %v452
    %v457 = vsel %vm222, %v448, %v450
    %v458 = vsel %vm222, %v454, %v448
    %v459 = vmul.f32 %v457, %v227
    %v460 = vmul.f32 %v456, %v228
    %v461 = vmul.f32 %v455, %v229
    %v462 = vmul.f32 %v458, %v230
    %463 = vrot.lane.b32.xlu0 %v345, 111
    %v464 = vpop.permute.xlu0 %463
    %465 = vrot.lane.b32.xlu0 %v346, 111
    %v466 = vpop.permute.xlu0 %465
    %467 = vrot.lane.b32.xlu0 %v347, 111
    %v468 = vpop.permute.xlu0 %467
    %469 = vrot.lane.b32.xlu0 %v348, 111
    %v470 = vpop.permute.xlu0 %469
    %v471 = vsel %vm243, %v468, %v470
    %v472 = vsel %vm243, %v466, %v468
    %v473 = vsel %vm243, %v464, %v466
    %v474 = vsel %vm243, %v470, %v464
    %v475 = vmul.f32 %v473, %v248
    %v476 = vmul.f32 %v472, %v249
    %v477 = vmul.f32 %v471, %v250
    %v478 = vmul.f32 %v474, %v251
    %480 = vset.pattern.permute.xlu0 0
    %481 = vperm.xlu0 %480, %v350
    %v482 = vpop.permute.xlu0 %481
    %v485 = vsel %vm261, %v349, 0
    %487 = vmatpush.msra.mxu0 0.0
    %488 = vmatpush.msra.mxu0 0.0
    %489 = vmatpush.msra.mxu0 0.0
    %490 = vmatpush.msra.mxu0 0.0
    %491 = vmatpush.msra.mxu0 0.0
    %492 = vmatpush.msra.mxu0 0.0
    %493 = vmatpush.msra.mxu0 0.0
    %494 = vmatpush.msra.mxu0 %v475
    %495 = vmatpush.msra.mxu0 %v459
    %496 = vmatpush.msra.mxu0 %v443
    %497 = vmatpush.msra.mxu0 %v427
    %498 = vmatpush.msra.mxu0 %v345
    %499 = vmatpush.msra.mxu0 %v411
    %500 = vmatpush.msra.mxu0 %v395
    %501 = vmatpush.msra.mxu0 %v379
    %502 = vmatpush.msra.mxu0 %v363
    %503 = vmatmul.f32.gmra.mxu0 %v485
    %v504 = vpop.f32.mrf.mxu0
    %v505 = vadd.f32 %v482, %v504
    %506 = vdwg.mxu0
    %507 = vmatpush.msra.mxu0 0.0
    %508 = vmatpush.msra.mxu0 0.0
    %509 = vmatpush.msra.mxu0 0.0
    %510 = vmatpush.msra.mxu0 0.0
    %511 = vmatpush.msra.mxu0 0.0
    %512 = vmatpush.msra.mxu0 0.0
    %513 = vmatpush.msra.mxu0 0.0
    %514 = vmatpush.msra.mxu0 %v476
    %515 = vmatpush.msra.mxu0 %v460
    %516 = vmatpush.msra.mxu0 %v444
    %517 = vmatpush.msra.mxu0 %v428
    %518 = vmatpush.msra.mxu0 %v346
    %519 = vmatpush.msra.mxu0 %v412
    %520 = vmatpush.msra.mxu0 %v396
    %521 = vmatpush.msra.mxu0 %v380
    %522 = vmatpush.msra.mxu0 %v364
    %523 = vmatmul.f32.gmra.mxu0 %v485
    %v524 = vpop.f32.mrf.mxu0
    %v525 = vadd.f32 %v482, %v524
    %526 = vdwg.mxu0
    %527 = vmatpush.msra.mxu0 0.0
    %528 = vmatpush.msra.mxu0 0.0
    %529 = vmatpush.msra.mxu0 0.0
    %530 = vmatpush.msra.mxu0 0.0
    %531 = vmatpush.msra.mxu0 0.0
    %532 = vmatpush.msra.mxu0 0.0
    %533 = vmatpush.msra.mxu0 0.0
    %534 = vmatpush.msra.mxu0 %v477
    %535 = vmatpush.msra.mxu0 %v461
    %536 = vmatpush.msra.mxu0 %v445
    %537 = vmatpush.msra.mxu0 %v429
    %538 = vmatpush.msra.mxu0 %v347
    %539 = vmatpush.msra.mxu0 %v413
    %540 = vmatpush.msra.mxu0 %v397
    %541 = vmatpush.msra.mxu0 %v381
    %542 = vmatpush.msra.mxu0 %v365
    %543 = vmatmul.f32.gmra.mxu0 %v485
    %v544 = vpop.f32.mrf.mxu0
    %v545 = vadd.f32 %v482, %v544
    %546 = vdwg.mxu0
    %547 = vmatpush.msra.mxu0 0.0
    %548 = vmatpush.msra.mxu0 0.0
    %549 = vmatpush.msra.mxu0 0.0
    %550 = vmatpush.msra.mxu0 0.0
    %551 = vmatpush.msra.mxu0 0.0
    %552 = vmatpush.msra.mxu0 0.0
    %553 = vmatpush.msra.mxu0 0.0
    %554 = vmatpush.msra.mxu0 %v478
    %555 = vmatpush.msra.mxu0 %v462
    %556 = vmatpush.msra.mxu0 %v446
    %557 = vmatpush.msra.mxu0 %v430
    %558 = vmatpush.msra.mxu0 %v348
    %559 = vmatpush.msra.mxu0 %v414
    %560 = vmatpush.msra.mxu0 %v398
    %561 = vmatpush.msra.mxu0 %v382
    %562 = vmatpush.msra.mxu0 %v366
    %563 = vmatmul.f32.gmra.mxu0 %v485
    %v564 = vpop.f32.mrf.mxu0
    %v565 = vadd.f32 %v482, %v564
    %566 = vdwg.mxu0
    %v567 = vmax.f32 %v505, 0.0
    %v568 = vmax.f32 %v525, 0.0
    %v569 = vmax.f32 %v545, 0.0
    %v570 = vmax.f32 %v565, 0.0
    %571 = vrot.lane.b32.xlu0 %v567, 127
    %v572 = vpop.permute.xlu0 %571
    %573 = vrot.lane.b32.xlu0 %v568, 127
    %v574 = vpop.permute.xlu0 %573
    %575 = vrot.lane.b32.xlu0 %v569, 127
    %v576 = vpop.permute.xlu0 %575
    %577 = vrot.lane.b32.xlu0 %v570, 127
    %v578 = vpop.permute.xlu0 %577
    %v579 = vsel %vm180, %v576, %v578
    %v580 = vsel %vm180, %v574, %v576
    %v581 = vsel %vm180, %v572, %v574
    %v582 = vsel %vm180, %v578, %v572
    %v583 = vmax.f32 %v567, %v581
    %v584 = vmax.f32 %v568, %v580
    %v585 = vmax.f32 %v569, %v579
    %v586 = vmax.f32 %v570, %v582
    %587 = vrot.lane.b32.xlu0 %v583, 112
    %v588 = vpop.permute.xlu0 %587
    %589 = vrot.lane.b32.xlu0 %v584, 112
    %v590 = vpop.permute.xlu0 %589
    %591 = vrot.lane.b32.xlu0 %v585, 112
    %v592 = vpop.permute.xlu0 %591
    %593 = vrot.lane.b32.xlu0 %v586, 112
    %v594 = vpop.permute.xlu0 %593
    %v595 = vsel %vm222, %v592, %v594
    %v596 = vsel %vm222, %v590, %v592
    %v597 = vsel %vm222, %v588, %v590
    %v598 = vsel %vm222, %v594, %v588
    %v599 = vmax.f32 %v583, %v597
    %v600 = vmax.f32 %v584, %v596
    %v601 = vmax.f32 %v585, %v595
    %v602 = vmax.f32 %v586, %v598
    %v603 = vld [vmem:[#allocation7] sm:$0xff]
    %v604 = vld [vmem:[#allocation7 + $0x8] sm:$0xff]
    %v605 = vld [vmem:[#allocation7 + $0x10] sm:$0xff]
    %v606 = vld [vmem:[#allocation7 + $0x18] sm:$0xff]
    %v607 = vld [vmem:[#allocation7 + $0x20] sm:$0xff]
    %v608 = vld [vmem:[#allocation7 + $0x28] sm:$0xff]
    %v609 = vld [vmem:[#allocation7 + $0x30] sm:$0xff]
    %v610 = vld [vmem:[#allocation7 + $0x38] sm:$0xff]
    %v611 = vld [vmem:[#allocation7 + $0x40] sm:$0xff]
    %v612 = vld [vmem:[#allocation7 + $0x48] sm:$0xff]
    %v613 = vld [vmem:[#allocation7 + $0x50] sm:$0xff]
    %v614 = vld [vmem:[#allocation7 + $0x58] sm:$0xff]
    %v615 = vld [vmem:[#allocation7 + $0x60] sm:$0xff]
    %v616 = vld [vmem:[#allocation7 + $0x68] sm:$0xff]
    %v617 = vld [vmem:[#allocation7 + $0x70] sm:$0xff]
    %v618 = vld [vmem:[#allocation7 + $0x78] sm:$0xff]
    %v619 = vld [vmem:[#allocation7 + $0x80] sm:$0xff]
    %v620 = vld [vmem:[#allocation7 + $0x88] sm:$0xff]
    %v621 = vld [vmem:[#allocation7 + $0x90] sm:$0xff]
    %v622 = vld [vmem:[#allocation7 + $0x98] sm:$0xff]
    %v623 = vld [vmem:[#allocation7 + $0xa0] sm:$0xff]
    %v624 = vld [vmem:[#allocation7 + $0xa8] sm:$0xff]
    %v625 = vld [vmem:[#allocation7 + $0xb0] sm:$0xff]
    %v626 = vld [vmem:[#allocation7 + $0xb8] sm:$0xff]
    %v627 = vld [vmem:[#allocation7 + $0xc0] sm:$0xff]
    %v628 = vld [vmem:[#allocation7 + $0xc8] sm:$0xff]
    %v629 = vld [vmem:[#allocation7 + $0xd0] sm:$0xff]
    %v630 = vld [vmem:[#allocation7 + $0xd8] sm:$0xff]
    %v631 = vld [vmem:[#allocation7 + $0xe0] sm:$0xff]
    %v632 = vld [vmem:[#allocation7 + $0xe8] sm:$0xff]
    %v633 = vld [vmem:[#allocation7 + $0xf0] sm:$0xff]
    %v634 = vld [vmem:[#allocation7 + $0xf8] sm:$0xff]
    %v635 = vld [vmem:[#allocation7 + $0x100] sm:$0xff]
    %v636 = vld [vmem:[#allocation7 + $0x108] sm:$0xff]
    %v637 = vld [vmem:[#allocation7 + $0x110] sm:$0xff]
    %v638 = vld [vmem:[#allocation7 + $0x118] sm:$0xff]
    %v639 = vld [vmem:[#allocation7 + $0x120] sm:$0xff]
    %v640 = vld [vmem:[#allocation7 + $0x128] sm:$0xff]
    %v641 = vld [vmem:[#allocation7 + $0x130] sm:$0xff]
    %v642 = vld [vmem:[#allocation7 + $0x138] sm:$0xff]
    %v643 = vld [vmem:[#allocation7 + $0x140] sm:$0xff]
    %v644 = vld [vmem:[#allocation7 + $0x148] sm:$0xff]
    %v645 = vld [vmem:[#allocation7 + $0x150] sm:$0xff]
    %v646 = vld [vmem:[#allocation7 + $0x158] sm:$0xff]
    %v647 = vld [vmem:[#allocation7 + $0x160] sm:$0xff]
    %v648 = vld [vmem:[#allocation7 + $0x168] sm:$0xff]
    %v649 = vld [vmem:[#allocation7 + $0x170] sm:$0xff]
    %v650 = vld [vmem:[#allocation7 + $0x178] sm:$0xff]
    %v651 = vld [vmem:[#allocation7 + $0x180] sm:$0xff]
    %v652 = vld [vmem:[#allocation7 + $0x188] sm:$0xff]
    %v653 = vld [vmem:[#allocation7 + $0x190] sm:$0xff]
    %v654 = vld [vmem:[#allocation7 + $0x198] sm:$0xff]
    %v655 = vld [vmem:[#allocation7 + $0x1a0] sm:$0xff]
    %v656 = vld [vmem:[#allocation7 + $0x1a8] sm:$0xff]
    %v657 = vld [vmem:[#allocation7 + $0x1b0] sm:$0xff]
    %v658 = vld [vmem:[#allocation7 + $0x1b8] sm:$0xff]
    %v659 = vld [vmem:[#allocation7 + $0x1c0] sm:$0xff]
    %v660 = vld [vmem:[#allocation7 + $0x1c8] sm:$0xff]
    %v661 = vld [vmem:[#allocation7 + $0x1d0] sm:$0xff]
    %v662 = vld [vmem:[#allocation7 + $0x1d8] sm:$0xff]
    %v663 = vld [vmem:[#allocation7 + $0x1e0] sm:$0xff]
    %v664 = vld [vmem:[#allocation7 + $0x1e8] sm:$0xff]
    %v665 = vld [vmem:[#allocation7 + $0x1f0] sm:$0xff]
    %v666 = vld [vmem:[#allocation7 + $0x1f8] sm:$0xff]
    %667 = vmatpush.msra.mxu0 %v618
    %668 = vmatpush.msra.mxu0 %v617
    %669 = vmatpush.msra.mxu0 %v616
    %670 = vmatpush.msra.mxu0 %v615
    %671 = vmatpush.msra.mxu0 %v614
    %672 = vmatpush.msra.mxu0 %v613
    %673 = vmatpush.msra.mxu0 %v612
    %674 = vmatpush.msra.mxu0 %v611
    %675 = vmatpush.msra.mxu0 %v610
    %676 = vmatpush.msra.mxu0 %v609
    %677 = vmatpush.msra.mxu0 %v608
    %678 = vmatpush.msra.mxu0 %v607
    %679 = vmatpush.msra.mxu0 %v606
    %680 = vmatpush.msra.mxu0 %v605
    %681 = vmatpush.msra.mxu0 %v604
    %682 = vmatpush.msra.mxu0 %v603
    %683 = vmatmul.f32.gmra.mxu0 %v599
    %v684 = vpop.f32.mrf.mxu0
    %v685 = vadd.f32 0.0, %v684
    %686 = vdwg.mxu0
    %687 = vmatpush.msra.mxu0 %v634
    %688 = vmatpush.msra.mxu0 %v633
    %689 = vmatpush.msra.mxu0 %v632
    %690 = vmatpush.msra.mxu0 %v631
    %691 = vmatpush.msra.mxu0 %v630
    %692 = vmatpush.msra.mxu0 %v629
    %693 = vmatpush.msra.mxu0 %v628
    %694 = vmatpush.msra.mxu0 %v627
    %695 = vmatpush.msra.mxu0 %v626
    %696 = vmatpush.msra.mxu0 %v625
    %697 = vmatpush.msra.mxu0 %v624
    %698 = vmatpush.msra.mxu0 %v623
    %699 = vmatpush.msra.mxu0 %v622
    %700 = vmatpush.msra.mxu0 %v621
    %701 = vmatpush.msra.mxu0 %v620
    %702 = vmatpush.msra.mxu0 %v619
    %703 = vmatmul.f32.gmra.mxu0 %v600
    %v704 = vpop.f32.mrf.mxu0
    %v705 = vadd.f32 %v685, %v704
    %706 = vdwg.mxu0
    %707 = vmatpush.msra.mxu0 %v650
    %708 = vmatpush.msra.mxu0 %v649
    %709 = vmatpush.msra.mxu0 %v648
    %710 = vmatpush.msra.mxu0 %v647
    %711 = vmatpush.msra.mxu0 %v646
    %712 = vmatpush.msra.mxu0 %v645
    %713 = vmatpush.msra.mxu0 %v644
    %714 = vmatpush.msra.mxu0 %v643
    %715 = vmatpush.msra.mxu0 %v642
    %716 = vmatpush.msra.mxu0 %v641
    %717 = vmatpush.msra.mxu0 %v640
    %718 = vmatpush.msra.mxu0 %v639
    %719 = vmatpush.msra.mxu0 %v638
    %720 = vmatpush.msra.mxu0 %v637
    %721 = vmatpush.msra.mxu0 %v636
    %722 = vmatpush.msra.mxu0 %v635
    %723 = vmatmul.f32.gmra.mxu0 %v601
    %v724 = vpop.f32.mrf.mxu0
    %v725 = vadd.f32 %v705, %v724
    %726 = vdwg.mxu0
    %727 = vmatpush.msra.mxu0 %v666
    %728 = vmatpush.msra.mxu0 %v665
    %729 = vmatpush.msra.mxu0 %v664
    %730 = vmatpush.msra.mxu0 %v663
    %731 = vmatpush.msra.mxu0 %v662
    %732 = vmatpush.msra.mxu0 %v661
    %733 = vmatpush.msra.mxu0 %v660
    %734 = vmatpush.msra.mxu0 %v659
    %735 = vmatpush.msra.mxu0 %v658
    %736 = vmatpush.msra.mxu0 %v657
    %737 = vmatpush.msra.mxu0 %v656
    %738 = vmatpush.msra.mxu0 %v655
    %739 = vmatpush.msra.mxu0 %v654
    %740 = vmatpush.msra.mxu0 %v653
    %741 = vmatpush.msra.mxu0 %v652
    %742 = vmatpush.msra.mxu0 %v651
    %743 = vmatmul.f32.gmra.mxu0 %v602
    %v744 = vpop.f32.mrf.mxu0
    %v745 = vadd.f32 %v725, %v744
    %746 = vdwg.mxu0
    %747 = vst [vmem:[#allocation8] sm:$0xff] %v745
    // Predicated region
    $region42: #{tpu_custom_call.1} parent=1 // pred_check
      _
    $region43: #{tpu_custom_call.1} parent=1 // pred_check_branch
      %749 = sbr.rel (0) target = $region45
    $region44: #{tpu_custom_call.1} parent=1 // pred_region
      %751 = vsyncadd [#allocation4], 0
      %s753 = sshll.u32 [#allocation8], 4
      %s754 = int_to_ptr.vmem [resolvable:$true] %s753
      %s755 = sshll.u32 %s7, 4
      %s756 = int_to_ptr.hbm [resolvable:$true] %s755
      %758 = dma.vmem_to_hbm [thread:$0]  %s754, 128, %s756, [#allocation4]
    $region45: #{tpu_custom_call.1} parent=1 // pred_fallthru
      _
    // Predicated region
    $region46: #{tpu_custom_call.1} parent=1 // pred_check
      _
    $region47: #{tpu_custom_call.1} parent=1 // pred_check_branch
      %760 = sbr.rel (0) target = $region49
    $region48: #{tpu_custom_call.1} parent=1 // pred_region
      %762 = dma.done [#allocation4], 128
    $region49: #{tpu_custom_call.1} parent=1 // pred_fallthru
      _
    %763 = vsyncpa [#allocation3], 1
    %764 = vsyncpa [#allocation6], 1
    %765 = vsyncpa [#allocation4], 1

</llo_original>
